<compile_context>
chip_gen: v6e
topology: v6e:2x2x1
jax: 0.10.0
libtpu: 0.0.40
codegen_flags: <defaults>
</compile_context>

<pallas_src>
import jax
import jax.numpy as jnp
import numpy as np
from jax.experimental import pallas as pl
from jax.experimental.pallas import tpu as pltpu


# ------------------------------------------------------------------
# Fused kernel: ShapeLayer (PCA ensembling) + 2-D homogeneous transform
# ------------------------------------------------------------------
def homogeneous_shape_kernel(params_ref, comps_ref, mean_ref, out_ref):
    # params_ref : (TN, C+4)  f32   [C PCA weights | scale, rot, tx, ty]
    # comps_ref  : (C+4, 2P)  bf16  coordinate-major [x-plane | y-plane];
    #                                last 4 rows are zeros (trafo lanes)
    # mean_ref   : (1, 2P)    f32   coordinate-major mean shape
    # out_ref    : (TN, 2P)   f32   x' in lanes [0, P), y' in lanes [P, 2P)
    K = comps_ref.shape[0]
    C = K - 4
    P = out_ref.shape[1] // 2

    p = params_ref[...]                                              # (TN, K) f32

    # ---- ShapeLayer: shape = mean + params @ comps (one bf16 MXU matmul) ----
    s = jnp.dot(p.astype(comps_ref.dtype), comps_ref[...],
                preferred_element_type=jnp.float32)                  # (TN, 2P)
    s = s + mean_ref[...]                                            # f32 mean add

    # x/y split at 128-aligned lane offsets (P is a multiple of 128).
    x = s[:, :P]                                                     # (TN, P)
    y = s[:, P:]                                                     # (TN, P)

    # ---- HomogeneousTransformationLayer (2-D) ----
    # trafo param order matches the module's buffer registration: scale, rot, t.
    scale = p[:, C:C + 1]                                            # (TN, 1)
    rot = p[:, C + 1:C + 2]                                          # (TN, 1)
    tx = p[:, C + 2:C + 3]                                           # (TN, 1)
    ty = p[:, C + 3:C + 4]                                           # (TN, 1)

    cr = scale * jnp.cos(rot)                                        # s*cos(r)
    sr = scale * jnp.sin(rot)                                        # s*sin(r)

    # x' =  s*cos(r)*x + s*sin(r)*y + tx
    # y' = -s*sin(r)*x + s*cos(r)*y + ty
    out_ref[:, :P] = (cr * x + sr * y + tx).astype(out_ref.dtype)
    out_ref[:, P:] = (-sr * x + cr * y + ty).astype(out_ref.dtype)


# ------------------------------------------------------------------
# One-time buffer preparation (module-buffer analogue; hoisted out of forward)
# ------------------------------------------------------------------
def _round_up(v, m):
    return (v + m - 1) // m * m


def prepare_shape_buffers(shapes):
    """Precompute coordinate-major, lane-padded, bf16 component buffers.

    shapes : (1 + C, P, 2) — shapes[0] is the mean, shapes[1:] the PCA comps.
    Returns (comps_cm_bf16 (C+4, 2*P_pad), mean_cm_f32 (1, 2*P_pad), P, P_pad, C).
    """
    shapes = jnp.asarray(shapes, jnp.float32)
    n_comp = int(shapes.shape[0]) - 1
    P = int(shapes.shape[1])
    D = int(shapes.shape[2])
    if D != 2:
        # TODO(synk): 3-D (n_dims == 3) rotation ensembling not implemented.
        raise NotImplementedError("only n_dims == 2 is implemented")

    P_pad = _round_up(P, 128)                      # lane-aligned point count
    mean = shapes[0]                               # (P, 2)
    comps = shapes[1:]                             # (C, P, 2)
    if P_pad != P:
        mean = jnp.pad(mean, ((0, P_pad - P), (0, 0)))
        comps = jnp.pad(comps, ((0, 0), (0, P_pad - P), (0, 0)))

    # Coordinate-major flatten: [x_0..x_{P-1}, y_0..y_{P-1}].
    mean_cm = jnp.transpose(mean, (1, 0)).reshape(1, D * P_pad)
    comps_cm = jnp.transpose(comps, (0, 2, 1)).reshape(n_comp, D * P_pad)
    # 4 zero rows for the trafo parameter lanes -> clean full-width MXU feed.
    comps_cm = jnp.pad(comps_cm, ((0, 4), (0, 0))).astype(jnp.bfloat16)

    return (jax.device_put(comps_cm), jax.device_put(mean_cm),
            P, P_pad, n_comp)


# ------------------------------------------------------------------
# Layer factory: precompute buffers once, return a jitted forward
# ------------------------------------------------------------------
def make_homogeneous_shape_layer(shapes, *, block_rows=512,
                                 coordinate_major_output=False):
    """Build the HomogeneousShapeLayer forward.

    forward(params):
      params : (N, C + 4) f32 (trailing singleton dims are squeezed) —
               [C shape params | scale, rotation, tx, ty]
      returns: (N, P, 2) f32 PyTorch layout, or the raw coordinate-major
               (N, 2P) slab if coordinate_major_output=True (x then y planes).
    """
    comps_cm, mean_cm, n_pts, n_pts_pad, n_comp = prepare_shape_buffers(shapes)
    K = n_comp + 4
    P2 = 2 * n_pts_pad

    def forward(params):
        params = jnp.asarray(params, jnp.float32)
        if params.ndim > 2:                         # e.g. (N, K, 1, 1) inputs
            params = params.reshape(params.shape[0], -1)
        N = params.shape[0]
        assert params.shape[1] == K, (params.shape, K)

        # Batch block: multiple of 8 rows, padded N divisible by the block.
        TN = _round_up(min(block_rows, _round_up(N, 8)), 8)
        N_pad = _round_up(N, TN)
        if N_pad != N:
            params = jnp.pad(params, ((0, N_pad - N), (0, 0)))

        out = pl.pallas_call(
            homogeneous_shape_kernel,
            out_shape=jax.ShapeDtypeStruct((N_pad, P2), jnp.float32),
            grid_spec=pltpu.PrefetchScalarGridSpec(
                num_scalar_prefetch=0,
                grid=(N_pad // TN,),
                in_specs=[
                    pl.BlockSpec((TN, K), lambda i: (i, 0)),
                    pl.BlockSpec((K, P2), lambda i: (0, 0)),   # VMEM-resident
                    pl.BlockSpec((1, P2), lambda i: (0, 0)),   # VMEM-resident
                ],
                out_specs=pl.BlockSpec((TN, P2), lambda i: (i, 0)),
            ),
            compiler_params=pltpu.CompilerParams(
                dimension_semantics=("parallel",)),
        )(params, comps_cm, mean_cm)

        if coordinate_major_output:
            # (N, 2P) slab: x in [:, :P], y in [:, P:].  No extra HBM pass
            # when no padding was needed.
            if N_pad != N or n_pts_pad != n_pts:
                out = out.reshape(N_pad, 2, n_pts_pad)[:N, :, :n_pts]
                out = out.reshape(N, 2 * n_pts)
            return out

        # Layout plumbing to PyTorch (N, P, 2) — accepted extra pass.
        out = out.reshape(N_pad, 2, n_pts_pad)
        out = jnp.transpose(out, (0, 2, 1))[:N, :n_pts, :]
        return out

    return jax.jit(forward)


# ------------------------------------------------------------------
# Pure-JAX reference (mirrors the PyTorch module) for a sanity check
# ------------------------------------------------------------------
def reference_forward(params, shapes):
    C = shapes.shape[0] - 1
    mean = shapes[0]                     # (P, 2)
    comps = shapes[1:]                   # (C, P, 2)
    w = params[:, :C]                    # (N, C)
    shp = mean[None] + jnp.einsum("nc,cpd->npd", w, comps)   # (N, P, 2)
    scale = params[:, C]
    rot = params[:, C + 1]
    t = params[:, C + 2:C + 4]           # (N, 2)
    cr = (scale * jnp.cos(rot))[:, None]
    sr = (scale * jnp.sin(rot))[:, None]
    x = shp[..., 0]
    y = shp[..., 1]
    ox = cr * x + sr * y + t[:, 0:1]
    oy = -sr * x + cr * y + t[:, 1:2]
    return jnp.stack([ox, oy], axis=-1)


if __name__ == "__main__":
    # Small shapes consistent with the module: batch=2, n_dims=2,
    # 4 PCA components, 128 landmark points -> num_params = 4 + 4 = 8.
    N, P, D, C = 2, 128, 2, 4

    key = jax.random.PRNGKey(0)
    k1, k2 = jax.random.split(key)
    shapes = jax.random.normal(k1, (1 + C, P, D), jnp.float32)          # mean + comps
    params = jax.random.normal(k2, (N, C + 4), jnp.float32) * 0.5       # shape+trafo params

    layer_forward = make_homogeneous_shape_layer(shapes)
    out = layer_forward(params)
    out = jax.block_until_ready(out)

    assert out.shape == (N, P, D), out.shape
    assert out.dtype == jnp.float32

    ref = reference_forward(params, shapes)
    # Loose tolerance accounts for bf16 MXU component feed (K <= 8).
    np.testing.assert_allclose(np.asarray(out), np.asarray(ref),
                               rtol=5e-2, atol=5e-2)

    print("KERNEL_OK")
</pallas_src>

<mosaic_0001>
module attributes {stable_mosaic.version = 11 : i64} {
  func.func @homogeneous_shape_kernel(%arg0: i32, %arg1: memref<8x8xf32, #tpu.memory_space<vmem>>, %arg2: memref<8x256xbf16, #tpu.memory_space<vmem>>, %arg3: memref<1x256xf32, #tpu.memory_space<vmem>>, %arg4: memref<8x256xf32, #tpu.memory_space<vmem>>) attributes {dimension_semantics = [#tpu.dimension_semantics<parallel>], iteration_bounds = array<i64: 1>, scalar_prefetch = 0 : i64, scratch_operands = 0 : i64, tpu.core_type = #tpu.core_type<tc>, window_params = [{transform_indices = @transform_0, window_bounds = array<i64: 8, 8>}, {pipeline_mode = #tpu.pipeline_mode<synchronous>, transform_indices = @transform_1, window_bounds = array<i64: 8, 256>}, {pipeline_mode = #tpu.pipeline_mode<synchronous>, transform_indices = @transform_2, window_bounds = array<i64: 1, 256>}, {transform_indices = @transform_3, window_bounds = array<i64: 8, 256>}]} {
    %c0 = arith.constant 0 : index
    %c0_0 = arith.constant 0 : index
    %0 = vector.load %arg1[%c0, %c0_0] : memref<8x8xf32, #tpu.memory_space<vmem>>, vector<8x8xf32>
    %1 = arith.truncf %0 : vector<8x8xf32> to vector<8x8xbf16>
    %c0_1 = arith.constant 0 : index
    %c0_2 = arith.constant 0 : index
    %2 = vector.load %arg2[%c0_1, %c0_2] : memref<8x256xbf16, #tpu.memory_space<vmem>>, vector<8x256xbf16>
    %cst = arith.constant dense<0.000000e+00> : vector<8x256xf32>
    %3 = tpu.matmul %1, %2, %cst {dimension_numbers = #tpu.dot_dimension_numbers<[1], [0], [0], [1], [0, 0, 1, 1], [], []>} : vector<8x8xbf16>, vector<8x256xbf16>, vector<8x256xf32> -> vector<8x256xf32>
    %c0_3 = arith.constant 0 : index
    %c0_4 = arith.constant 0 : index
    %4 = vector.load %arg3[%c0_3, %c0_4] : memref<1x256xf32, #tpu.memory_space<vmem>>, vector<1x256xf32>
    %5 = vector.broadcast %4 : vector<1x256xf32> to vector<8x256xf32>
    %6 = arith.addf %3, %5 : vector<8x256xf32>
    %7 = vector.extract_strided_slice %6 {offsets = [0, 0], sizes = [8, 128], strides = [1, 1]} : vector<8x256xf32> to vector<8x128xf32>
    %8 = vector.extract_strided_slice %6 {offsets = [0, 128], sizes = [8, 128], strides = [1, 1]} : vector<8x256xf32> to vector<8x128xf32>
    %9 = vector.extract_strided_slice %0 {offsets = [0, 4], sizes = [8, 1], strides = [1, 1]} : vector<8x8xf32> to vector<8x1xf32>
    %10 = vector.extract_strided_slice %0 {offsets = [0, 5], sizes = [8, 1], strides = [1, 1]} : vector<8x8xf32> to vector<8x1xf32>
    %11 = vector.extract_strided_slice %0 {offsets = [0, 6], sizes = [8, 1], strides = [1, 1]} : vector<8x8xf32> to vector<8x1xf32>
    %12 = vector.extract_strided_slice %0 {offsets = [0, 7], sizes = [8, 1], strides = [1, 1]} : vector<8x8xf32> to vector<8x1xf32>
    %13 = math.cos %10 : vector<8x1xf32>
    %14 = arith.mulf %9, %13 : vector<8x1xf32>
    %15 = math.sin %10 : vector<8x1xf32>
    %16 = arith.mulf %9, %15 : vector<8x1xf32>
    %17 = vector.broadcast %14 : vector<8x1xf32> to vector<8x128xf32>
    %18 = arith.mulf %17, %7 : vector<8x128xf32>
    %19 = vector.broadcast %16 : vector<8x1xf32> to vector<8x128xf32>
    %20 = arith.mulf %19, %8 : vector<8x128xf32>
    %21 = arith.addf %18, %20 : vector<8x128xf32>
    %22 = vector.broadcast %11 : vector<8x1xf32> to vector<8x128xf32>
    %23 = arith.addf %21, %22 : vector<8x128xf32>
    %c0_5 = arith.constant 0 : index
    %c0_6 = arith.constant 0 : index
    %24 = vector.load %arg4[%c0_5, %c0_6] : memref<8x256xf32, #tpu.memory_space<vmem>>, vector<8x128xf32>
    tpu.vector_store %arg4[%c0_5, %c0_6], %23 {strides = array<i32>} : memref<8x256xf32, #tpu.memory_space<vmem>>, vector<8x128xf32>,
    %cst_7 = arith.constant 0.000000e+00 : f32
    %25 = vector.broadcast %cst_7 : f32 to vector<8x1xf32>
    %26 = arith.subf %25, %16 : vector<8x1xf32>
    %27 = vector.broadcast %26 : vector<8x1xf32> to vector<8x128xf32>
    %28 = arith.mulf %27, %7 : vector<8x128xf32>
    %29 = vector.broadcast %14 : vector<8x1xf32> to vector<8x128xf32>
    %30 = arith.mulf %29, %8 : vector<8x128xf32>
    %31 = arith.addf %28, %30 : vector<8x128xf32>
    %32 = vector.broadcast %12 : vector<8x1xf32> to vector<8x128xf32>
    %33 = arith.addf %31, %32 : vector<8x128xf32>
    %c0_8 = arith.constant 0 : index
    %c128 = arith.constant 128 : index
    %34 = vector.load %arg4[%c0_8, %c128] : memref<8x256xf32, #tpu.memory_space<vmem>>, vector<8x128xf32>
    tpu.vector_store %arg4[%c0_8, %c128], %33 {strides = array<i32>} : memref<8x256xf32, #tpu.memory_space<vmem>>, vector<8x128xf32>,
    return
  }
  func.func @transform_0(%arg0: i32) -> (i32, i32) {
    %c0_i32 = arith.constant 0 : i32
    %c0_i32_0 = arith.constant 0 : i32
    return %arg0, %c0_i32 : i32, i32
  }
  func.func @transform_1(%arg0: i32) -> (i32, i32) {
    %c0_i32 = arith.constant 0 : i32
    %c0_i32_0 = arith.constant 0 : i32
    %c0_i32_1 = arith.constant 0 : i32
    return %c0_i32, %c0_i32_0 : i32, i32
  }
  func.func @transform_2(%arg0: i32) -> (i32, i32) {
    %c0_i32 = arith.constant 0 : i32
    %c0_i32_0 = arith.constant 0 : i32
    %c0_i32_1 = arith.constant 0 : i32
    return %c0_i32, %c0_i32_0 : i32, i32
  }
  func.func @transform_3(%arg0: i32) -> (i32, i32) {
    %c0_i32 = arith.constant 0 : i32
    %c0_i32_0 = arith.constant 0 : i32
    return %arg0, %c0_i32 : i32, i32
  }
}

</mosaic_0001>

<llo_original>
// kernel: forward.1
$region0: #{forward.1}
  #allocation0 [shape = 'u32[]', space=smem, size = 0x4, offset = 0x4, fixed_abs, tag = 'smem constant byte address 0x4 - core index']
  #allocation1 [shape = 'u32[144,128]{1,0:T(1,128)}', space=vmem, size = 0x12000, scoped, tag = 'internal scratch']
  %s0 = inlined_call_operand.vmem [shape: f32[8,8], index: 0, kind: input, shape index: {}]
  %s1 = inlined_call_operand.vmem [shape: bf16[8,256], index: 1, kind: input, shape index: {}]
  %s2 = inlined_call_operand.vmem [shape: f32[1,256], index: 2, kind: input, shape index: {}]
  %s3 = inlined_call_operand.vmem [shape: f32[8,256], index: 3, kind: output, shape index: {}]
  %s4 = sld [smem:[#allocation0]]
  $region22: #{forward.1} parent=0
    _
  %s6 = ssub.s32 1, %s4
  %s7 = scalar_select 0, %s6, %s4
  // Predicated region
  $region2: #{forward.1} parent=0 // pred_check
    _
  $region3: #{forward.1} parent=0 // pred_check_branch
    %9 = sbr.rel (0) target = $region5
  $region4: #{forward.1} parent=0 // pred_region
    _
  $region5: #{forward.1} parent=0 // pred_fallthru
    _
  // Predicated region
  $region6: #{forward.1} parent=0 // pred_check
    _
  $region7: #{forward.1} parent=0 // pred_check_branch
    %11 = sbr.rel (0) target = $region9
  $region8: #{forward.1} parent=0 // pred_region
    _
  $region9: #{forward.1} parent=0 // pred_fallthru
    _
  // Predicated region
  $region10: #{forward.1} parent=0 // pred_check
    _
  $region11: #{forward.1} parent=0 // pred_check_branch
    %13 = sbr.rel (0) target = $region13
  $region12: #{forward.1} parent=0 // pred_region
    _
  $region13: #{forward.1} parent=0 // pred_fallthru
    _
  %v15 = vld [vmem:[%s0] sm:$0xff]
  %v16 = vpack.c.bf16 %v15, %v15
  %v17 = vld [vmem:[%s1] sm:$0xff]
  %v18 = vld [vmem:[%s2] sm:$0x3]
  %v20 = vlaneseq
  %v21 = vshrl.u32 %v20, 7
  %v22 = vsub.s32 0, %v21
  %v23 = vrot.slane %v18, %v22
  %v24 = vlaneseq
  %v25 = vshrl.u32 %v24, 7
  %v26 = vsub.s32 1, %v25
  %v27 = vrot.slane %v18, %v26
  %v31 = vunpack.c.l.b16 %v17
  %v32 = vunpack.c.h.b16 %v17
  %v33 = vpack.c.b16 %v31, %v31
  %v34 = vpack.c.b16 %v32, %v32
  %vm35 = vcmask 64512
  %v37 = vsel %vm35, %v16, 0
  %vm39 = vcmask 1043456
  %v41 = vsel %vm39, %v33, 0
  %v44 = vsel %vm39, %v34, 0
  %46 = vmatprep.subr.bf16.mxu0 0
  %47 = vmatpush1.bf16.msra.mxu0 0
  %48 = vmatprep.subr.bf16.mxu0 0
  %49 = vmatpush1.bf16.msra.mxu0 0
  %50 = vmatprep.subr.bf16.mxu0 0
  %51 = vmatpush1.bf16.msra.mxu0 0
  %52 = vmatprep.subr.bf16.mxu0 0
  %53 = vmatpush1.bf16.msra.mxu0 0
  %54 = vmatprep.subr.bf16.mxu0 0
  %55 = vmatpush1.bf16.msra.mxu0 0
  %56 = vmatprep.subr.bf16.mxu0 0
  %57 = vmatpush1.bf16.msra.mxu0 0
  %58 = vmatprep.subr.bf16.mxu0 0
  %59 = vmatpush1.bf16.msra.mxu0 0
  %60 = vmatprep.subr.bf16.mxu0 %v44
  %61 = vmatpush1.bf16.msra.mxu0 %v41
  %62 = vmatprep.subr.bf16.mxu0 0
  %63 = vmatpush2.bf16.msra.mxu0 0
  %64 = vmatprep.subr.bf16.mxu0 0
  %65 = vmatpush2.bf16.msra.mxu0 0
  %66 = vmatprep.subr.bf16.mxu0 0
  %67 = vmatpush2.bf16.msra.mxu0 0
  %68 = vmatprep.subr.bf16.mxu0 0
  %69 = vmatpush2.bf16.msra.mxu0 0
  %70 = vmatprep.subr.bf16.mxu0 0
  %71 = vmatpush2.bf16.msra.mxu0 0
  %72 = vmatprep.subr.bf16.mxu0 0
  %73 = vmatpush2.bf16.msra.mxu0 0
  %74 = vmatprep.subr.bf16.mxu0 0
  %75 = vmatpush2.bf16.msra.mxu0 0
  %76 = vmatprep.subr.bf16.mxu0 0
  %77 = vmatpush2.bf16.msra.mxu0 0
  %78 = vmatprep.mubr.bf16.mxu0 0
  %79 = vmatmul.mubr.bf16.gmra.mxu0 %v37
  %v80 = vpop.f32.mrf.mxu0
  %v81 = vadd.f32 %v23, %v80
  %v82 = vpop.f32.mrf.mxu0
  %v83 = vadd.f32 %v27, %v82
  %v84 = vpop.f32.mrf.mxu0
  %v85 = vpop.f32.mrf.mxu0
  %86 = vdwg.mxu0
  %v87 = vand.u32 2147483647, %v15
  %vm88 = vcmp.le.f32.partialorder %v87, 0.7853982
  %vm89 = vcmp.lt.s32.totalorder %v15, 0
  %v90 = vand.u32 %v15, 2139095040
  %v91 = vshrl.u32 %v90, 23
  %v92 = vsub.s32 %v91, 127
  %v93 = vand.u32 2147483647, %v15
  %v94 = vand.u32 %v93, 8388607
  %v95 = vor.u32 %v94, 8388608
  %v96 = vsub.s32 0, %v95
  %v97 = vadd.s32 %v92, 1
  %vm98 = vcmp.gt.s32.totalorder %v97, 0
  %v99 = vsel %vm98, %v97, 0
  %v100 = vshrl.u32 %v99, 5
  %v101 = vand.u32 %v99, 31
  %v102 = vsub.s32 32, %v101
  %v103 = vshrl.u32 683565275, %v102
  %v104 = vshll.u32 683565275, %v101
  %v105 = vshrl.u32 2475754826, %v102
  %v106 = vor.u32 %v104, %v105
  %v107 = vshll.u32 2475754826, %v101
  %v108 = vshrl.u32 2131351028, %v102
  %v109 = vor.u32 %v107, %v108
  %v110 = vshll.u32 2131351028, %v101
  %v111 = vshrl.u32 2102212464, %v102
  %v112 = vor.u32 %v110, %v111
  %v113 = vshll.u32 2102212464, %v101
  %v114 = vshrl.u32 920167782, %v102
  %v115 = vor.u32 %v113, %v114
  %v116 = vshll.u32 920167782, %v101
  %v117 = vshrl.u32 1326507024, %v102
  %v118 = vor.u32 %v116, %v117
  %vm119 = vcmp.lt.s32.totalorder %v100, 1
  %vm120 = vcmp.lt.s32.totalorder %v100, 2
  %vm121 = vcmp.lt.s32.totalorder %v100, 3
  %vm122 = vcmp.lt.s32.totalorder %v100, 4
  %v123 = vsel %vm119, %v103, %v106
  %v124 = vsel %vm122, %v112, 2102212464
  %v125 = vsel %vm121, %v109, %v124
  %v126 = vsel %vm120, %v123, %v125
  %v127 = vsel %vm119, %v106, %v109
  %v128 = vsel %vm122, %v115, 920167782
  %v129 = vsel %vm121, %v112, %v128
  %v130 = vsel %vm120, %v127, %v129
  %v131 = vsel %vm119, %v109, %v112
  %v132 = vsel %vm122, %v118, 1326507024
  %v133 = vsel %vm121, %v115, %v132
  %v134 = vsel %vm120, %v131, %v133
  %v135 = vshll.u32 %v95, 8
  %v136 = vmul.u32.u64.compose %v135, %v134
  %v137 = vextract.low.u32 %v136
  %v138 = vextract.high.u32 %v136
  %v139 = vmul.u32.u64.compose %v135, %v130
  %v140 = vextract.low.u32 %v139
  %v141 = vextract.high.u32 %v139
  %v142 = vmul.u32 %v135, %v126
  %v143 = vadd.s32 %v138, %v140
  %vm144 = vc.u32 %v138, %v140
  %v145 = vadd.s32 %v141, 1
  %v146 = vsel %vm144, %v145, %v141
  %v147 = vadd.s32 %v142, %v146
  %v148 = vadd.s32 %v147, 536870912
  %v149 = vshrl.u32 %v148, 30
  %v150 = vshll.u32 %v149, 30
  %v151 = vsub.s32 %v147, %v150
  %vm152 = vcmp.lt.s32.totalorder %v151, 0
  %v153 = vsub.s32 0, %v151
  %v154 = vsel %vm152, %v153, %v151
  %v155 = vclz %v154
  %v156 = vsub.s32 %v155, 2
  %vm157 = vcmp.gt.s32.totalorder 0, %v156
  %v158 = vsel %vm157, 0, %v156
  %v159 = vsub.s32 32, %v158
  %v160 = vshll.u32 %v151, %v158
  %v161 = vshrl.u32 %v143, %v159
  %v162 = vor.u32 %v160, %v161
  %v163 = vsub.s32 4294967266, %v158
  %v164 = vadd.s32 %v163, 127
  %v165 = vshll.u32 %v164, 23
  %v166 = vor.u32 4788187, %v165
  %v167 = vand.u32 2147483647, %v166
  %v169 = vcvt.s32.f32 %v162
  %v170 = vmul.f32 %v169, %v167
  %v171 = vxor.u32 %v170, 2147483648
  %v172 = vsel %vm89, %v171, %v170
  %v173 = vsub.s32 4, %v149
  %v174 = vsel %vm89, %v173, %v149
  %v175 = vsel %vm88, %v15, %v172
  %v176 = vsel %vm88, 0, %v174
  %v177 = vcosq.f32.pop %v175
  %v178 = vsinq.f32.pop %v175
  %vm179 = vweird.f32 %v15
  %v180 = vand.u32 %v176, 3
  %vm181 = vcmp.lt.s32.totalorder %v180, 2
  %vm182 = vcmp.eq.s32.totalorder %v180, 0
  %v183 = vxor.u32 %v178, 2147483648
  %v184 = vsel %vm182, %v177, %v183
  %vm185 = vcmp.eq.s32.totalorder %v180, 2
  %v186 = vxor.u32 %v177, 2147483648
  %v187 = vsel %vm185, %v186, %v178
  %v188 = vsel %vm181, %v184, %v187
  %v189 = vsel %vm179, nan, %v188
  %191 = vrot.lane.b32.xlu0 %v189, 127
  %v192 = vpop.permute.xlu0 %191
  %v194 = vmul.f32 %v15, %v192
  %v195 = vand.u32 2147483647, %v15
  %vm196 = vcmp.le.f32.partialorder %v195, 0.7853982
  %vm197 = vcmp.lt.s32.totalorder %v15, 0
  %v198 = vand.u32 %v15, 2139095040
  %v199 = vshrl.u32 %v198, 23
  %v200 = vsub.s32 %v199, 127
  %v201 = vand.u32 2147483647, %v15
  %v202 = vand.u32 %v201, 8388607
  %v203 = vor.u32 %v202, 8388608
  %v204 = vsub.s32 0, %v203
  %v205 = vadd.s32 %v200, 1
  %vm206 = vcmp.gt.s32.totalorder %v205, 0
  %v207 = vsel %vm206, %v205, 0
  %v208 = vshrl.u32 %v207, 5
  %v209 = vand.u32 %v207, 31
  %v210 = vsub.s32 32, %v209
  %v211 = vshrl.u32 683565275, %v210
  %v212 = vshll.u32 683565275, %v209
  %v213 = vshrl.u32 2475754826, %v210
  %v214 = vor.u32 %v212, %v213
  %v215 = vshll.u32 2475754826, %v209
  %v216 = vshrl.u32 2131351028, %v210
  %v217 = vor.u32 %v215, %v216
  %v218 = vshll.u32 2131351028, %v209
  %v219 = vshrl.u32 2102212464, %v210
  %v220 = vor.u32 %v218, %v219
  %v221 = vshll.u32 2102212464, %v209
  %v222 = vshrl.u32 920167782, %v210
  %v223 = vor.u32 %v221, %v222
  %v224 = vshll.u32 920167782, %v209
  %v225 = vshrl.u32 1326507024, %v210
  %v226 = vor.u32 %v224, %v225
  %vm227 = vcmp.lt.s32.totalorder %v208, 1
  %vm228 = vcmp.lt.s32.totalorder %v208, 2
  %vm229 = vcmp.lt.s32.totalorder %v208, 3
  %vm230 = vcmp.lt.s32.totalorder %v208, 4
  %v231 = vsel %vm227, %v211, %v214
  %v232 = vsel %vm230, %v220, 2102212464
  %v233 = vsel %vm229, %v217, %v232
  %v234 = vsel %vm228, %v231, %v233
  %v235 = vsel %vm227, %v214, %v217
  %v236 = vsel %vm230, %v223, 920167782
  %v237 = vsel %vm229, %v220, %v236
  %v238 = vsel %vm228, %v235, %v237
  %v239 = vsel %vm227, %v217, %v220
  %v240 = vsel %vm230, %v226, 1326507024
  %v241 = vsel %vm229, %v223, %v240
  %v242 = vsel %vm228, %v239, %v241
  %v243 = vshll.u32 %v203, 8
  %v244 = vmul.u32.u64.compose %v243, %v242
  %v245 = vextract.low.u32 %v244
  %v246 = vextract.high.u32 %v244
  %v247 = vmul.u32.u64.compose %v243, %v238
  %v248 = vextract.low.u32 %v247
  %v249 = vextract.high.u32 %v247
  %v250 = vmul.u32 %v243, %v234
  %v251 = vadd.s32 %v246, %v248
  %vm252 = vc.u32 %v246, %v248
  %v253 = vadd.s32 %v249, 1
  %v254 = vsel %vm252, %v253, %v249
  %v255 = vadd.s32 %v250, %v254
  %v256 = vadd.s32 %v255, 536870912
  %v257 = vshrl.u32 %v256, 30
  %v258 = vshll.u32 %v257, 30
  %v259 = vsub.s32 %v255, %v258
  %vm260 = vcmp.lt.s32.totalorder %v259, 0
  %v261 = vsub.s32 0, %v259
  %v262 = vsel %vm260, %v261, %v259
  %v263 = vclz %v262
  %v264 = vsub.s32 %v263, 2
  %vm265 = vcmp.gt.s32.totalorder 0, %v264
  %v266 = vsel %vm265, 0, %v264
  %v267 = vsub.s32 32, %v266
  %v268 = vshll.u32 %v259, %v266
  %v269 = vshrl.u32 %v251, %v267
  %v270 = vor.u32 %v268, %v269
  %v271 = vsub.s32 4294967266, %v266
  %v272 = vadd.s32 %v271, 127
  %v273 = vshll.u32 %v272, 23
  %v274 = vor.u32 4788187, %v273
  %v275 = vand.u32 2147483647, %v274
  %v277 = vcvt.s32.f32 %v270
  %v278 = vmul.f32 %v277, %v275
  %v279 = vxor.u32 %v278, 2147483648
  %v280 = vsel %vm197, %v279, %v278
  %v281 = vsub.s32 4, %v257
  %v282 = vsel %vm197, %v281, %v257
  %v283 = vsel %vm196, %v15, %v280
  %v284 = vsel %vm196, 0, %v282
  %v285 = vcosq.f32.pop %v283
  %v286 = vsinq.f32.pop %v283
  %vm287 = vweird.f32 %v15
  %v288 = vadd.s32 %v284, 3
  %v289 = vand.u32 %v288, 3
  %vm290 = vcmp.lt.s32.totalorder %v289, 2
  %vm291 = vcmp.eq.s32.totalorder %v289, 0
  %v292 = vxor.u32 %v286, 2147483648
  %v293 = vsel %vm291, %v285, %v292
  %vm294 = vcmp.eq.s32.totalorder %v289, 2
  %v295 = vxor.u32 %v285, 2147483648
  %v296 = vsel %vm294, %v295, %v286
  %v297 = vsel %vm290, %v293, %v296
  %v298 = vsel %vm287, nan, %v297
  %300 = vrot.lane.b32.xlu0 %v298, 127
  %v301 = vpop.permute.xlu0 %300
  %v303 = vmul.f32 %v15, %v301
  %305 = vset.pattern.permute.xlu0 4
  %306 = vperm.xlu0 %305, %v194
  %v307 = vpop.permute.xlu0 %306
  %v309 = vmul.f32 %v307, %v81
  %311 = vset.pattern.permute.xlu0 4
  %312 = vperm.xlu0 %311, %v303
  %v313 = vpop.permute.xlu0 %312
  %v315 = vmul.f32 %v313, %v83
  %v316 = vadd.f32 %v309, %v315
  %318 = vset.pattern.permute.xlu0 6
  %319 = vperm.xlu0 %318, %v15
  %v320 = vpop.permute.xlu0 %319
  %v322 = vadd.f32 %v316, %v320
  %323 = vst [vmem:[%s3] sm:$0xff] %v322
  %v324 = vsub.f32 0.0, %v303
  %326 = vset.pattern.permute.xlu0 4
  %327 = vperm.xlu0 %326, %v324
  %v328 = vpop.permute.xlu0 %327
  %v330 = vmul.f32 %v328, %v81
  %v331 = vmul.f32 %v307, %v83
  %v332 = vadd.f32 %v330, %v331
  %333 = vset.pattern.permute.xlu0 7
  %334 = vperm.xlu0 %333, %v15
  %v335 = vpop.permute.xlu0 %334
  %v337 = vadd.f32 %v332, %v335
  %338 = vst [vmem:[%s3 + $0x8] sm:$0xff] %v337
  // Predicated region
  $region14: #{forward.1} parent=0 // pred_check
    _
  $region15: #{forward.1} parent=0 // pred_check_branch
    %340 = sbr.rel (0) target = $region17
  $region16: #{forward.1} parent=0 // pred_region
    _
  $region17: #{forward.1} parent=0 // pred_fallthru
    _
  // Predicated region
  $region18: #{forward.1} parent=0 // pred_check
    _
  $region19: #{forward.1} parent=0 // pred_check_branch
    %342 = sbr.rel (0) target = $region21
  $region20: #{forward.1} parent=0 // pred_region
    _
  $region21: #{forward.1} parent=0 // pred_fallthru
    _

</llo_original>
